<compile_context>
chip_gen: v5e
topology: v5e:2x2
jax: 0.10.0
libtpu: 0.0.40
codegen_flags: <defaults>
</compile_context>

<pallas_src>
import functools

import jax
import jax.numpy as jnp
from jax.experimental import pallas as pl
from jax.experimental.pallas import tpu as pltpu


NUM_CORES = 2                        # grid split for v7x megacore; harmless on 1-TC chips
VMEM_TILE_BUDGET = 8 * 1024 * 1024   # bytes allowed for one double-buffered set of input tiles


def _round_up(x, m):
    return (x + m - 1) // m * m


def _choose_batch_tile(b, c_pad, d, itemsize):
    # Largest multiple-of-16 batch tile whose double-buffered input tiles stay
    # inside VMEM_TILE_BUDGET, capped at 1024 rows.
    bytes_per_row = (c_pad * d + d) * itemsize
    cap = max(16, (VMEM_TILE_BUDGET // (2 * bytes_per_row)) // 16 * 16)
    return int(min(1024, cap, _round_up(b, 16)))


def _log_sigmoid(x):
    # numerically stable logsigmoid(x) = min(x, 0) - log1p(exp(-|x|))
    return jnp.minimum(x, 0.0) - jnp.log1p(jnp.exp(-jnp.abs(x)))


def _skipgram_loss_kernel(center_ref, ctx_ref, out_ref, *,
                          total_b, tile_b, steps_per_core, n_pos, n_neg):
    core = pl.program_id(0)
    step = pl.program_id(1)

    # Zero this core's resident accumulator block at its first inner step.
    @pl.when(step == 0)
    def _():
        out_ref[...] = jnp.zeros_like(out_ref)

    # bf16 in HBM/VMEM, f32 math (v5e has no bf16 VALU/EUP; keeps accumulation exact).
    center = center_ref[...].astype(jnp.float32)             # [TB, D]
    ctx = ctx_ref[...].astype(jnp.float32)                    # [TB, C, D]

    # Batched dot product kept OFF the MXU: VPU multiply + cross-lane reduce
    # (D=32, C<=24 would waste >75% of the systolic array and force relayouts).
    logits = jnp.sum(ctx * center[:, None, :], axis=-1)       # [TB, C]

    c_pad = logits.shape[1]
    slot = jax.lax.broadcasted_iota(jnp.int32, (1, c_pad), 1)            # [1, C]
    sign = jnp.where(slot < n_pos, 1.0,
                     jnp.where(slot < n_pos + n_neg, -1.0, 0.0))         # [1, C]
    valid_slot = slot < (n_pos + n_neg)                                  # [1, C]

    tile_idx = core * steps_per_core + step
    row = jax.lax.broadcasted_iota(jnp.int32, (tile_b, 1), 0) + tile_idx * tile_b
    valid_row = row < total_b                                            # [TB, 1]

    mask = jnp.logical_and(valid_row, valid_slot)                        # [TB, C]
    contrib = jnp.where(mask, _log_sigmoid(sign * logits), 0.0)          # [TB, C]

    # Elementwise accumulate into this core's resident block; collapsing to a
    # scalar happens exactly once, in the wrapper.
    out_ref[...] += contrib[None, :, :]


def skipgram_loss(center_emb, ctx_emb, *, total_b, tile_b, n_pos, n_neg):
    """center_emb: [B_pad, D] bf16, ctx_emb: [B_pad, C_pad, D] bf16 (already padded)."""
    b_pad, c_pad, d = ctx_emb.shape
    assert center_emb.shape == (b_pad, d)
    assert b_pad % (tile_b * NUM_CORES) == 0
    num_tiles = b_pad // tile_b
    steps_per_core = num_tiles // NUM_CORES

    kernel = functools.partial(
        _skipgram_loss_kernel,
        total_b=total_b, tile_b=tile_b, steps_per_core=steps_per_core,
        n_pos=n_pos, n_neg=n_neg)

    grid_spec = pltpu.PrefetchScalarGridSpec(
        num_scalar_prefetch=0,
        grid=(NUM_CORES, steps_per_core),
        in_specs=[
            pl.BlockSpec((tile_b, d),
                         lambda c, i: (c * steps_per_core + i, 0)),
            pl.BlockSpec((tile_b, c_pad, d),
                         lambda c, i: (c * steps_per_core + i, 0, 0)),
        ],
        # One resident accumulator block per core (same block index for every
        # inner step -> zeroed at step 0, accumulated, written back once).
        out_specs=pl.BlockSpec((1, tile_b, c_pad), lambda c, i: (c, 0, 0)),
    )

    itemsize = jnp.dtype(center_emb.dtype).itemsize
    cost = pl.CostEstimate(
        flops=2 * b_pad * c_pad * d,
        transcendentals=2 * b_pad * c_pad,
        bytes_accessed=(b_pad * d + b_pad * c_pad * d) * itemsize
                       + NUM_CORES * tile_b * c_pad * 4,
    )

    partials = pl.pallas_call(
        kernel,
        out_shape=jax.ShapeDtypeStruct((NUM_CORES, tile_b, c_pad), jnp.float32),
        grid_spec=grid_spec,
        compiler_params=pltpu.CompilerParams(
            # Leading axis feeds v7x's two TensorCores; inner axis accumulates
            # sequentially (do NOT mark it parallel).
            dimension_semantics=("parallel", "arbitrary"),
            # Explicit budget: double-buffered bf16 input tiles + the f32
            # accumulator block stay well under this on v5e/v6e (128 MiB
            # physical) and v7x (64 MiB physical).
            vmem_limit_bytes=32 * 1024 * 1024,
        ),
        cost_estimate=cost,
    )(center_emb, ctx_emb)

    # Tiny finalization outside the kernel: cross-core/cross-tile sum + mean.
    return -jnp.sum(partials) / total_b


def skipgram_forward(params, center_word, pos_word, neg_word):
    """Faithful port of SkipGram.forward: -mean_b[ sum_c logsigmoid(+/- <ctx_c, center>) ]."""
    b = center_word.shape[0]
    n_pos = pos_word.shape[1]
    n_neg = neg_word.shape[1]
    d = params["in_embedding"].shape[1]

    c_raw = n_pos + n_neg
    c_pad = _round_up(c_raw, 8)
    tile_b = _choose_batch_tile(b, c_pad, d, itemsize=2)      # bf16 stream
    b_pad = _round_up(b, tile_b * NUM_CORES)

    # Pad only the (tiny) int32 id arrays; the gathered float tensors then come
    # out already tile-aligned -- no jnp.pad on the big [B, C, D] tensor.
    ctx_word = jnp.concatenate([pos_word, neg_word], axis=1)             # [B, P+N]
    if c_pad != c_raw:
        ctx_word = jnp.pad(ctx_word, ((0, 0), (0, c_pad - c_raw)))
    if b_pad != b:
        ctx_word = jnp.pad(ctx_word, ((0, b_pad - b), (0, 0)))
        center_word = jnp.pad(center_word, ((0, b_pad - b),))

    # Embedding gathers stay in XLA for now (see TODO at top of file); the
    # streams handed to the kernel are bf16.
    center_emb = jnp.take(params["in_embedding"], center_word, axis=0
                          ).astype(jnp.bfloat16)                         # [B_pad, D]
    ctx_emb = jnp.take(params["out_embedding"], ctx_word, axis=0
                       ).astype(jnp.bfloat16)                            # [B_pad, C_pad, D]

    return skipgram_loss(center_emb, ctx_emb, total_b=b, tile_b=tile_b,
                         n_pos=n_pos, n_neg=n_neg)


def xavier_uniform(key, shape, dtype=jnp.float32):
    fan_in, fan_out = shape[0], shape[1]
    bound = jnp.sqrt(6.0 / (fan_in + fan_out))
    return jax.random.uniform(key, shape, dtype=dtype,
                              minval=-bound, maxval=bound)


if __name__ == "__main__":
    VOCAB_SIZE = 50
    D_MODEL = 32
    BATCH = 2
    WINDOW_SIZE = 2
    K = 5
    P = WINDOW_SIZE * 2          # 4
    N = WINDOW_SIZE * 2 * K      # 20

    key = jax.random.PRNGKey(0)
    k_in, k_out, k_c, k_p, k_n = jax.random.split(key, 5)

    params = {
        "in_embedding": xavier_uniform(k_in, (VOCAB_SIZE, D_MODEL)),
        "out_embedding": xavier_uniform(k_out, (VOCAB_SIZE, D_MODEL)),
    }

    center_word = jax.random.randint(k_c, (BATCH,), 0, VOCAB_SIZE, dtype=jnp.int32)
    pos_word = jax.random.randint(k_p, (BATCH, P), 0, VOCAB_SIZE, dtype=jnp.int32)
    neg_word = jax.random.randint(k_n, (BATCH, N), 0, VOCAB_SIZE, dtype=jnp.int32)

    loss = jax.jit(skipgram_forward)(params, center_word, pos_word, neg_word)
    jax.block_until_ready(loss)

    # Pure-JAX reference with the same bf16 rounding of the embedding stream.
    def ref_forward():
        c = jnp.take(params["in_embedding"], center_word, axis=0
                     ).astype(jnp.bfloat16).astype(jnp.float32)
        p = jnp.take(params["out_embedding"], pos_word, axis=0
                     ).astype(jnp.bfloat16).astype(jnp.float32)
        n = jnp.take(params["out_embedding"], neg_word, axis=0
                     ).astype(jnp.bfloat16).astype(jnp.float32)
        lp = jnp.sum(p * c[:, None, :], axis=-1)           # [B, P]
        ln = jnp.sum(n * (-c)[:, None, :], axis=-1)        # [B, N]
        ls = jax.nn.log_sigmoid
        l = jnp.sum(ls(lp), axis=1) + jnp.sum(ls(ln), axis=1)
        return -jnp.mean(l)

    ref = ref_forward()
    assert jnp.allclose(loss, ref, atol=1e-4, rtol=1e-4), (loss, ref)
    print("KERNEL_OK")
</pallas_src>

<mosaic_0001>
module attributes {stable_mosaic.version = 11 : i64} {
  func.func @_skipgram_loss_kernel(%arg0: i32, %arg1: i32, %arg2: memref<16x32xbf16, #tpu.memory_space<vmem>>, %arg3: memref<16x24x32xbf16, #tpu.memory_space<vmem>>, %arg4: memref<1x16x24xf32, #tpu.memory_space<vmem>>) attributes {dimension_semantics = [#tpu.dimension_semantics<parallel>, #tpu.dimension_semantics<arbitrary>], iteration_bounds = array<i64: 2, 1>, scalar_prefetch = 0 : i64, scratch_operands = 0 : i64, tpu.core_type = #tpu.core_type<tc>, window_params = [{transform_indices = @transform_0, window_bounds = array<i64: 16, 32>}, {transform_indices = @transform_1, window_bounds = array<i64: 16, 24, 32>}, {transform_indices = @transform_2, window_bounds = array<i64: 1, 16, 24>}]} {
    %c0_i32 = arith.constant 0 : i32
    %0 = arith.cmpi eq, %arg1, %c0_i32 : i32
    %1 = arith.extui %0 : i1 to i32
    %c0_i32_0 = arith.constant 0 : i32
    %2 = arith.cmpi ne, %1, %c0_i32_0 : i32
    scf.if %2 {
      %cst_18 = arith.constant 0.000000e+00 : f32
      %50 = vector.broadcast %cst_18 : f32 to vector<1x16x24xf32>
      %c0_19 = arith.constant 0 : index
      %c0_20 = arith.constant 0 : index
      %c0_21 = arith.constant 0 : index
      %51 = vector.load %arg4[%c0_19, %c0_20, %c0_21] : memref<1x16x24xf32, #tpu.memory_space<vmem>>, vector<1x16x24xf32>
      tpu.vector_store %arg4[%c0_19, %c0_20, %c0_21], %50 {strides = array<i32>} : memref<1x16x24xf32, #tpu.memory_space<vmem>>, vector<1x16x24xf32>,
    } else {
    }
    %c0 = arith.constant 0 : index
    %c0_1 = arith.constant 0 : index
    %3 = vector.load %arg2[%c0, %c0_1] : memref<16x32xbf16, #tpu.memory_space<vmem>>, vector<16x32xbf16>
    %4 = arith.extf %3 : vector<16x32xbf16> to vector<16x32xf32>
    %c0_2 = arith.constant 0 : index
    %c0_3 = arith.constant 0 : index
    %c0_4 = arith.constant 0 : index
    %5 = vector.load %arg3[%c0_2, %c0_3, %c0_4] : memref<16x24x32xbf16, #tpu.memory_space<vmem>>, vector<16x24x32xbf16>
    %6 = arith.extf %5 : vector<16x24x32xbf16> to vector<16x24x32xf32>
    %7 = vector.shape_cast %4 : vector<16x32xf32> to vector<16x1x32xf32>
    %8 = vector.broadcast %7 : vector<16x1x32xf32> to vector<16x24x32xf32>
    %9 = arith.mulf %6, %8 : vector<16x24x32xf32>
    %cst = arith.constant dense<0.000000e+00> : vector<16x24xf32>
    %10 = vector.multi_reduction <add>, %9, %cst [2] : vector<16x24x32xf32> to vector<16x24xf32>
    %11 = tpu.iota {dimensions = array<i32: 1>} : vector<1x24xi32>
    %c4_i32 = arith.constant 4 : i32
    %12 = vector.broadcast %c4_i32 : i32 to vector<1x24xi32>
    %13 = arith.cmpi slt, %11, %12 : vector<1x24xi32>
    %c24_i32 = arith.constant 24 : i32
    %14 = vector.broadcast %c24_i32 : i32 to vector<1x24xi32>
    %15 = arith.cmpi slt, %11, %14 : vector<1x24xi32>
    %cst_5 = arith.constant -1.000000e+00 : f32
    %cst_6 = arith.constant 0.000000e+00 : f32
    %16 = vector.broadcast %cst_5 : f32 to vector<1x24xf32>
    %17 = vector.broadcast %cst_6 : f32 to vector<1x24xf32>
    %18 = arith.select %15, %16, %17 : vector<1x24xi1>, vector<1x24xf32>
    %cst_7 = arith.constant 1.000000e+00 : f32
    %19 = vector.broadcast %cst_7 : f32 to vector<1x24xf32>
    %20 = arith.select %13, %19, %18 : vector<1x24xi1>, vector<1x24xf32>
    %c24_i32_8 = arith.constant 24 : i32
    %21 = vector.broadcast %c24_i32_8 : i32 to vector<1x24xi32>
    %22 = arith.cmpi slt, %11, %21 : vector<1x24xi32>
    %c1_i32 = arith.constant 1 : i32
    %23 = arith.muli %arg0, %c1_i32 : i32
    %24 = arith.addi %23, %arg1 : i32
    %25 = tpu.iota {dimensions = array<i32: 0>} : vector<16x1xi32>
    %c16_i32 = arith.constant 16 : i32
    %26 = arith.muli %24, %c16_i32 : i32
    %27 = vector.broadcast %26 : i32 to vector<16x1xi32>
    %28 = arith.addi %25, %27 : vector<16x1xi32>
    %c2_i32 = arith.constant 2 : i32
    %29 = vector.broadcast %c2_i32 : i32 to vector<16x1xi32>
    %30 = arith.cmpi slt, %28, %29 : vector<16x1xi32>
    %31 = vector.broadcast %30 : vector<16x1xi1> to vector<16x24xi1>
    %32 = vector.broadcast %22 : vector<1x24xi1> to vector<16x24xi1>
    %33 = arith.andi %31, %32 : vector<16x24xi1>
    %34 = vector.broadcast %20 : vector<1x24xf32> to vector<16x24xf32>
    %35 = arith.mulf %34, %10 : vector<16x24xf32>
    %cst_9 = arith.constant 0.000000e+00 : f32
    %36 = vector.broadcast %cst_9 : f32 to vector<16x24xf32>
    %37 = arith.minimumf %35, %36 : vector<16x24xf32>
    %38 = math.absf %35 : vector<16x24xf32>
    %cst_10 = arith.constant 0.000000e+00 : f32
    %39 = vector.broadcast %cst_10 : f32 to vector<16x24xf32>
    %40 = arith.subf %39, %38 : vector<16x24xf32>
    %41 = math.exp %40 : vector<16x24xf32>
    %42 = math.log1p %41 : vector<16x24xf32>
    %43 = arith.subf %37, %42 : vector<16x24xf32>
    %cst_11 = arith.constant 0.000000e+00 : f32
    %44 = vector.broadcast %cst_11 : f32 to vector<16x24xf32>
    %45 = arith.select %33, %43, %44 : vector<16x24xi1>, vector<16x24xf32>
    %c0_12 = arith.constant 0 : index
    %c0_13 = arith.constant 0 : index
    %c0_14 = arith.constant 0 : index
    %46 = vector.load %arg4[%c0_12, %c0_13, %c0_14] : memref<1x16x24xf32, #tpu.memory_space<vmem>>, vector<1x16x24xf32>
    %47 = vector.shape_cast %45 : vector<16x24xf32> to vector<1x16x24xf32>
    %48 = arith.addf %46, %47 : vector<1x16x24xf32>
    %c0_15 = arith.constant 0 : index
    %c0_16 = arith.constant 0 : index
    %c0_17 = arith.constant 0 : index
    %49 = vector.load %arg4[%c0_15, %c0_16, %c0_17] : memref<1x16x24xf32, #tpu.memory_space<vmem>>, vector<1x16x24xf32>
    tpu.vector_store %arg4[%c0_15, %c0_16, %c0_17], %48 {strides = array<i32>} : memref<1x16x24xf32, #tpu.memory_space<vmem>>, vector<1x16x24xf32>,
    return
  }
  func.func @transform_0(%arg0: i32, %arg1: i32) -> (i32, i32) {
    %c1_i32 = arith.constant 1 : i32
    %0 = arith.muli %arg0, %c1_i32 : i32
    %1 = arith.addi %0, %arg1 : i32
    %c0_i32 = arith.constant 0 : i32
    %c0_i32_0 = arith.constant 0 : i32
    return %1, %c0_i32 : i32, i32
  }
  func.func @transform_1(%arg0: i32, %arg1: i32) -> (i32, i32, i32) {
    %c1_i32 = arith.constant 1 : i32
    %0 = arith.muli %arg0, %c1_i32 : i32
    %1 = arith.addi %0, %arg1 : i32
    %c0_i32 = arith.constant 0 : i32
    %c0_i32_0 = arith.constant 0 : i32
    %c0_i32_1 = arith.constant 0 : i32
    return %1, %c0_i32, %c0_i32_0 : i32, i32, i32
  }
  func.func @transform_2(%arg0: i32, %arg1: i32) -> (i32, i32, i32) {
    %c0_i32 = arith.constant 0 : i32
    %c0_i32_0 = arith.constant 0 : i32
    %c0_i32_1 = arith.constant 0 : i32
    return %arg0, %c0_i32, %c0_i32_0 : i32, i32, i32
  }
}

</mosaic_0001>

<llo_original>
// kernel: skipgram_forward.1
$region0: #{skipgram_forward.1}
  #allocation0 [shape = 'u32[]', space=smem, size = 0x4, offset = 0x4, fixed_abs, tag = 'smem constant byte address 0x4 - core index']
  #allocation1 [shape = 'u32[72,128]{1,0:T(1,128)}', space=vmem, size = 0x9000, scoped, tag = 'internal scratch']
  %s0 = inlined_call_operand.vmem [shape: bf16[32,32], index: 0, kind: input, shape index: {}]
  %s1 = inlined_call_operand.vmem [shape: bf16[32,24,32], index: 1, kind: input, shape index: {}]
  %s2 = inlined_call_operand.vmem [shape: f32[2,16,24], index: 2, kind: output, shape index: {}]
  %s3 = sld [smem:[#allocation0]]
  $region45: #{skipgram_forward.1} parent=0
    _
  %s5 = ssub.s32 1, %s3
  %s6 = scalar_select 0, %s5, %s3
  loop: start=0, step=1, limit=4
  $region2: #{skipgram_forward.1} parent=0 // loop_pre_header
    _
  $region3: #{skipgram_forward.1} parent=0 // loop_header
    %s8 = sphi 0, %s12
    %p9 = scmp.ge.s32.totalorder %s8, 4
    %s15 = sphi 0, %s27
    %s16 = sphi 0, %s23
    %s17 = sphi 0, %s15
    %s18 = sphi 0, %s16
    %s19 = sphi 0, %s17
    %s20 = sphi 0, %s18
    %s32 = sphi 0, %s34
    %s35 = sphi 0, %s32
    %s36 = sphi 0, %s35
    %s52 = sphi 0, %s36
    %s60 = sphi 0, %s62
    %s63 = sphi 0, %s60
    %s64 = sphi 0, %s63
    %s80 = sphi 0, %s64
    %s86 = sphi 0, %s88
    %s89 = sphi 0, %s86
    %s90 = sphi 0, %s89
    %s106 = sphi 0, %s90
  $region4: #{skipgram_forward.1} parent=0 // loop_header_branch
    %11 = sbr.rel (%p9) target = $region8
  $region5: #{skipgram_forward.1} parent=0 // loop_body
    %s13 = ssub.s32 %s8, 1
    %s14 = ssub.s32 %s8, 2
    %s21 = sadd.s32 1, %s16
    %p22 = scmp.ge.s32.totalorder %s21, 1
    %s23 = scalar_select %p22, 0, %s21
    %s24 = sadd.s32 1, %s15
    %s25 = scalar_select %p22, %s24, %s15
    %p26 = scmp.ge.s32.totalorder %s25, 2
    %s27 = scalar_select %p26, 0, %s25
    %s28 = sadd.s32 %s15, %s16
    %s29 = sadd.s32 %s27, %s23
    %s30 = ssub.s32 %s28, %s29
    %p31 = scmp.eq.s32.totalorder %s30, 0
    %s33 = sadd.s32 %s32, 1
    %s34 = scalar_select %p31, %s32, %s33
    %p37 = pneg %p31
    %p38 = scmp.eq.s32.totalorder %s8, 1
    %p39 = por %p37, %p38
    %p40 = scmp.ne.s32.totalorder %s32, %s35
    %p41 = scmp.eq.s32.totalorder %s8, 0
    %p42 = por %p40, %p41
    %p43 = scmp.ne.s32.totalorder %s32, %s35
    %p44 = scmp.eq.s32.totalorder %s13, 1
    %p45 = por %p43, %p44
    %p46 = scmp.ne.s32.totalorder %s35, %s36
    %p47 = scmp.eq.s32.totalorder %s13, 0
    %p48 = por %p46, %p47
    %p49 = scmp.ne.s32.totalorder %s35, %s36
    %p50 = scmp.eq.s32.totalorder %s14, 1
    %p51 = por %p49, %p50
    %p53 = scmp.ne.s32.totalorder %s36, %s52
    %p54 = scmp.eq.s32.totalorder %s14, 0
    %p55 = por %p53, %p54
    %s56 = sadd.s32 %s15, %s16
    %s57 = sadd.s32 %s27, %s23
    %s58 = ssub.s32 %s56, %s57
    %p59 = scmp.eq.s32.totalorder %s58, 0
    %s61 = sadd.s32 %s60, 1
    %s62 = scalar_select %p59, %s60, %s61
    %p65 = pneg %p59
    %p66 = scmp.eq.s32.totalorder %s8, 1
    %p67 = por %p65, %p66
    %p68 = scmp.ne.s32.totalorder %s60, %s63
    %p69 = scmp.eq.s32.totalorder %s8, 0
    %p70 = por %p68, %p69
    %p71 = scmp.ne.s32.totalorder %s60, %s63
    %p72 = scmp.eq.s32.totalorder %s13, 1
    %p73 = por %p71, %p72
    %p74 = scmp.ne.s32.totalorder %s63, %s64
    %p75 = scmp.eq.s32.totalorder %s13, 0
    %p76 = por %p74, %p75
    %p77 = scmp.ne.s32.totalorder %s63, %s64
    %p78 = scmp.eq.s32.totalorder %s14, 1
    %p79 = por %p77, %p78
    %p81 = scmp.ne.s32.totalorder %s64, %s80
    %p82 = scmp.eq.s32.totalorder %s14, 0
    %p83 = por %p81, %p82
    %s84 = ssub.s32 %s15, %s27
    %p85 = scmp.eq.s32.totalorder %s84, 0
    %s87 = sadd.s32 %s86, 1
    %s88 = scalar_select %p85, %s86, %s87
    %p91 = pneg %p85
    %p92 = scmp.eq.s32.totalorder %s8, 1
    %p93 = por %p91, %p92
    %p94 = scmp.ne.s32.totalorder %s86, %s89
    %p95 = scmp.eq.s32.totalorder %s8, 0
    %p96 = por %p94, %p95
    %p97 = scmp.ne.s32.totalorder %s86, %s89
    %p98 = scmp.eq.s32.totalorder %s13, 1
    %p99 = por %p97, %p98
    %p100 = scmp.ne.s32.totalorder %s89, %s90
    %p101 = scmp.eq.s32.totalorder %s13, 0
    %p102 = por %p100, %p101
    %p103 = scmp.ne.s32.totalorder %s89, %s90
    %p104 = scmp.eq.s32.totalorder %s14, 1
    %p105 = por %p103, %p104
    %p107 = scmp.ne.s32.totalorder %s90, %s106
    %p108 = scmp.eq.s32.totalorder %s14, 0
    %p109 = por %p107, %p108
    %p110 = scmp.le.s32.totalorder 1, %s8
    %p111 = scmp.lt.s32.totalorder %s8, 3
    %p112 = pnand %p110, %p111
    %p113 = pneg %p112
    // Predicated region
    $region9: #{skipgram_forward.1} parent=5 // pred_check
      _
    $region10: #{skipgram_forward.1} parent=5 // pred_check_branch
      %115 = sbr.rel (%p112) target = $region12
    $region11: #{skipgram_forward.1} parent=5 // pred_region
      %s116 = ssub.s32 %s8, 1
    $region12: #{skipgram_forward.1} parent=5 // pred_fallthru
      _
    %p117 = scmp.lt.s32.totalorder %s8, 2
    // Predicated region
    $region13: #{skipgram_forward.1} parent=5 // pred_check
      %p118 = pneg %p117
    $region14: #{skipgram_forward.1} parent=5 // pred_check_branch
      %120 = sbr.rel (%p118) target = $region16
    $region15: #{skipgram_forward.1} parent=5 // pred_region
      // Predicated region
      $region17: #{skipgram_forward.1} parent=15 // pred_check
        %p121 = pneg %p42
      $region18: #{skipgram_forward.1} parent=15 // pred_check_branch
        %123 = sbr.rel (%p121) target = $region20
      $region19: #{skipgram_forward.1} parent=15 // pred_region
        %s124 = sadd.s32 %s15, %s16
        %s125 = smul.u32 2, %s124
        %p126 = scmp.lt.s32.totalorder %s125, 3
        %s127 = scalar_select %p126, %s125, 3
        %s128 = smul.addr %s127, 4
        %s129 = scalar_lea.vmem %s0, %s128
        %s130 = sadd.s32 %s15, %s16
        %s131 = smul.u32 2, %s130
      $region20: #{skipgram_forward.1} parent=15 // pred_fallthru
        _
      // Predicated region
      $region21: #{skipgram_forward.1} parent=15 // pred_check
        %p132 = pneg %p70
      $region22: #{skipgram_forward.1} parent=15 // pred_check_branch
        %134 = sbr.rel (%p132) target = $region24
      $region23: #{skipgram_forward.1} parent=15 // pred_region
        %s135 = sadd.s32 %s15, %s16
        %s136 = smul.u32 16, %s135
        %p137 = scmp.lt.s32.totalorder %s136, 31
        %s138 = scalar_select %p137, %s136, 31
        %s139 = smul.addr %s138, 3
        %s140 = smul.addr %s139, 4
        %s141 = scalar_lea.vmem %s1, %s140
        %s142 = sadd.s32 %s15, %s16
        %s143 = smul.u32 16, %s142
      $region24: #{skipgram_forward.1} parent=15 // pred_fallthru
        _
    $region16: #{skipgram_forward.1} parent=5 // pred_fallthru
      _
    %p144 = scmp.le.s32.totalorder 1, %s8
    %p145 = scmp.lt.s32.totalorder %s8, 3
    %p146 = pnand %p144, %p145
    %p147 = pneg %p146
    // Predicated region
    $region25: #{skipgram_forward.1} parent=5 // pred_check
      _
    $region26: #{skipgram_forward.1} parent=5 // pred_check_branch
      %149 = sbr.rel (%p146) target = $region28
    $region27: #{skipgram_forward.1} parent=5 // pred_region
      %s150 = ssub.s32 %s8, 1
      %s151 = sadd.s32 %s17, %s18
      %s152 = smul.u32 2, %s151
      %p153 = scmp.lt.s32.totalorder %s152, 3
      %s154 = scalar_select %p153, %s152, 3
      %s155 = smul.addr %s154, 4
      %s156 = scalar_lea.vmem %s0, %s155
      %p157 = pneg %p48
      %p158 = pneg %p45
      %s159 = sadd.s32 %s17, %s18
      %s160 = smul.u32 16, %s159
      %p161 = scmp.lt.s32.totalorder %s160, 31
      %s162 = scalar_select %p161, %s160, 31
      %s163 = smul.addr %s162, 3
      %s164 = smul.addr %s163, 4
      %s165 = scalar_lea.vmem %s1, %s164
      %p166 = pneg %p76
      %p167 = pneg %p73
      %p168 = pneg %p102
      %p169 = pneg %p99
      %p170 = scmp.lt.s32.totalorder %s17, 1
      %s171 = scalar_select %p170, %s17, 1
      %s172 = smul.addr %s171, 2
      %s173 = smul.addr %s172, 8
      %s174 = scalar_lea.vmem %s2, %s173
      %s175 = sadd.s32 %s17, %s18
      %s176 = smul.u32 2, %s175
      %p177 = scmp.lt.s32.totalorder %s176, 3
      %s178 = scalar_select %p177, %s176, 3
      %s179 = smul.addr %s178, 4
      %s180 = scalar_lea.vmem %s0, %s179
      %s181 = sadd.s32 %s17, %s18
      %s182 = smul.u32 2, %s181
      %s183 = sadd.s32 %s17, %s18
      %s184 = smul.u32 16, %s183
      %p185 = scmp.lt.s32.totalorder %s184, 31
      %s186 = scalar_select %p185, %s184, 31
      %s187 = smul.addr %s186, 3
      %s188 = smul.addr %s187, 4
      %s189 = scalar_lea.vmem %s1, %s188
      %s190 = sadd.s32 %s17, %s18
      %s191 = smul.u32 16, %s190
      %p192 = scmp.lt.s32.totalorder %s17, 1
      %s193 = scalar_select %p192, %s17, 1
      %s194 = smul.addr %s193, 2
      %s195 = smul.addr %s194, 8
      %s196 = scalar_lea.vmem %s2, %s195
      %p197 = scmp.eq.s32.totalorder %s18, 0
      // Predicated region
      $region29: #{skipgram_forward.1} parent=27 // pred_check
        %p198 = pneg %p197
      $region30: #{skipgram_forward.1} parent=27 // pred_check_branch
        %200 = sbr.rel (%p198) target = $region32
      $region31: #{skipgram_forward.1} parent=27 // pred_region
        %vm201 = vcmask 195584
        %202 = vst.msk [vmem:[%s196] sm:$0xff] %vm201, 0.0
        %203 = vst.msk [vmem:[%s196 + $0x8] sm:$0xff] %vm201, 0.0
      $region32: #{skipgram_forward.1} parent=27 // pred_fallthru
        _
      %v204 = vld [vmem:[%s180] sm:$0xf]
      %v205 = vld [vmem:[%s180 + $0x4] sm:$0xf]
      %v206 = vunpack.c.l.bf16 %v204
      %v207 = vunpack.c.l.bf16 %v205
      %v208 = vld [vmem:[%s189] sm:$0xf]
      %v209 = vld [vmem:[%s189 + $0x4] sm:$0xf]
      %v210 = vld [vmem:[%s189 + $0x8] sm:$0xf]
      %v211 = vld [vmem:[%s189 + $0xc] sm:$0xf]
      %v212 = vld [vmem:[%s189 + $0x10] sm:$0xf]
      %v213 = vld [vmem:[%s189 + $0x14] sm:$0xf]
      %v214 = vld [vmem:[%s189 + $0x18] sm:$0xf]
      %v215 = vld [vmem:[%s189 + $0x1c] sm:$0xf]
      %v216 = vld [vmem:[%s189 + $0x20] sm:$0xf]
      %v217 = vld [vmem:[%s189 + $0x24] sm:$0xf]
      %v218 = vld [vmem:[%s189 + $0x28] sm:$0xf]
      %v219 = vld [vmem:[%s189 + $0x2c] sm:$0xf]
      %v220 = vld [vmem:[%s189 + $0x30] sm:$0xf]
      %v221 = vld [vmem:[%s189 + $0x34] sm:$0xf]
      %v222 = vld [vmem:[%s189 + $0x38] sm:$0xf]
      %v223 = vld [vmem:[%s189 + $0x3c] sm:$0xf]
      %v224 = vld [vmem:[%s189 + $0x40] sm:$0xf]
      %v225 = vld [vmem:[%s189 + $0x44] sm:$0xf]
      %v226 = vld [vmem:[%s189 + $0x48] sm:$0xf]
      %v227 = vld [vmem:[%s189 + $0x4c] sm:$0xf]
      %v228 = vld [vmem:[%s189 + $0x50] sm:$0xf]
      %v229 = vld [vmem:[%s189 + $0x54] sm:$0xf]
      %v230 = vld [vmem:[%s189 + $0x58] sm:$0xf]
      %v231 = vld [vmem:[%s189 + $0x5c] sm:$0xf]
      %v232 = vld [vmem:[%s189 + $0x60] sm:$0xf]
      %v233 = vld [vmem:[%s189 + $0x64] sm:$0xf]
      %v234 = vld [vmem:[%s189 + $0x68] sm:$0xf]
      %v235 = vld [vmem:[%s189 + $0x6c] sm:$0xf]
      %v236 = vld [vmem:[%s189 + $0x70] sm:$0xf]
      %v237 = vld [vmem:[%s189 + $0x74] sm:$0xf]
      %v238 = vld [vmem:[%s189 + $0x78] sm:$0xf]
      %v239 = vld [vmem:[%s189 + $0x7c] sm:$0xf]
      %v240 = vld [vmem:[%s189 + $0x80] sm:$0xf]
      %v241 = vld [vmem:[%s189 + $0x84] sm:$0xf]
      %v242 = vld [vmem:[%s189 + $0x88] sm:$0xf]
      %v243 = vld [vmem:[%s189 + $0x8c] sm:$0xf]
      %v244 = vld [vmem:[%s189 + $0x90] sm:$0xf]
      %v245 = vld [vmem:[%s189 + $0x94] sm:$0xf]
      %v246 = vld [vmem:[%s189 + $0x98] sm:$0xf]
      %v247 = vld [vmem:[%s189 + $0x9c] sm:$0xf]
      %v248 = vld [vmem:[%s189 + $0xa0] sm:$0xf]
      %v249 = vld [vmem:[%s189 + $0xa4] sm:$0xf]
      %v250 = vld [vmem:[%s189 + $0xa8] sm:$0xf]
      %v251 = vld [vmem:[%s189 + $0xac] sm:$0xf]
      %v252 = vld [vmem:[%s189 + $0xb0] sm:$0xf]
      %v253 = vld [vmem:[%s189 + $0xb4] sm:$0xf]
      %v254 = vld [vmem:[%s189 + $0xb8] sm:$0xf]
      %v255 = vld [vmem:[%s189 + $0xbc] sm:$0xf]
      %v256 = vunpack.c.l.bf16 %v208
      %v257 = vunpack.c.l.bf16 %v209
      %v258 = vunpack.c.l.bf16 %v210
      %v259 = vunpack.c.l.bf16 %v211
      %v260 = vunpack.c.l.bf16 %v212
      %v261 = vunpack.c.l.bf16 %v213
      %v262 = vunpack.c.l.bf16 %v214
      %v263 = vunpack.c.l.bf16 %v215
      %v264 = vunpack.c.l.bf16 %v216
      %v265 = vunpack.c.l.bf16 %v217
      %v266 = vunpack.c.l.bf16 %v218
      %v267 = vunpack.c.l.bf16 %v219
      %v268 = vunpack.c.l.bf16 %v220
      %v269 = vunpack.c.l.bf16 %v221
      %v270 = vunpack.c.l.bf16 %v222
      %v271 = vunpack.c.l.bf16 %v223
      %v272 = vunpack.c.l.bf16 %v224
      %v273 = vunpack.c.l.bf16 %v225
      %v274 = vunpack.c.l.bf16 %v226
      %v275 = vunpack.c.l.bf16 %v227
      %v276 = vunpack.c.l.bf16 %v228
      %v277 = vunpack.c.l.bf16 %v229
      %v278 = vunpack.c.l.bf16 %v230
      %v279 = vunpack.c.l.bf16 %v231
      %v280 = vunpack.c.l.bf16 %v232
      %v281 = vunpack.c.l.bf16 %v233
      %v282 = vunpack.c.l.bf16 %v234
      %v283 = vunpack.c.l.bf16 %v235
      %v284 = vunpack.c.l.bf16 %v236
      %v285 = vunpack.c.l.bf16 %v237
      %v286 = vunpack.c.l.bf16 %v238
      %v287 = vunpack.c.l.bf16 %v239
      %v288 = vunpack.c.l.bf16 %v240
      %v289 = vunpack.c.l.bf16 %v241
      %v290 = vunpack.c.l.bf16 %v242
      %v291 = vunpack.c.l.bf16 %v243
      %v292 = vunpack.c.l.bf16 %v244
      %v293 = vunpack.c.l.bf16 %v245
      %v294 = vunpack.c.l.bf16 %v246
      %v295 = vunpack.c.l.bf16 %v247
      %v296 = vunpack.c.l.bf16 %v248
      %v297 = vunpack.c.l.bf16 %v249
      %v298 = vunpack.c.l.bf16 %v250
      %v299 = vunpack.c.l.bf16 %v251
      %v300 = vunpack.c.l.bf16 %v252
      %v301 = vunpack.c.l.bf16 %v253
      %v302 = vunpack.c.l.bf16 %v254
      %v303 = vunpack.c.l.bf16 %v255
      %v306 = vrot.slane %v206, 1
      %v307 = vrot.slane %v206, 2
      %v308 = vrot.slane %v206, 3
      %v309 = vrot.slane %v206, 4
      %v310 = vrot.slane %v206, 5
      %v311 = vrot.slane %v206, 6
      %v312 = vrot.slane %v206, 7
      %v313 = vrot.slane %v207, 1
      %v314 = vrot.slane %v207, 2
      %v315 = vrot.slane %v207, 3
      %v316 = vrot.slane %v207, 4
      %v317 = vrot.slane %v207, 5
      %v318 = vrot.slane %v207, 6
      %v319 = vrot.slane %v207, 7
      %v320 = vperm.slane %v206, 0
      %v321 = vperm.slane %v306, 0
      %v322 = vperm.slane %v307, 0
      %v323 = vperm.slane %v308, 0
      %v324 = vperm.slane %v309, 0
      %v325 = vperm.slane %v310, 0
      %v326 = vperm.slane %v311, 0
      %v327 = vperm.slane %v312, 0
      %v328 = vperm.slane %v207, 0
      %v329 = vperm.slane %v313, 0
      %v330 = vperm.slane %v314, 0
      %v331 = vperm.slane %v315, 0
      %v332 = vperm.slane %v316, 0
      %v333 = vperm.slane %v317, 0
      %v334 = vperm.slane %v318, 0
      %v335 = vperm.slane %v319, 0
      %v352 = vmul.f32 %v256, %v320
      %v353 = vmul.f32 %v257, %v320
      %v354 = vmul.f32 %v258, %v320
      %v355 = vmul.f32 %v259, %v321
      %v356 = vmul.f32 %v260, %v321
      %v357 = vmul.f32 %v261, %v321
      %v358 = vmul.f32 %v262, %v322
      %v359 = vmul.f32 %v263, %v322
      %v360 = vmul.f32 %v264, %v322
      %v361 = vmul.f32 %v265, %v323
      %v362 = vmul.f32 %v266, %v323
      %v363 = vmul.f32 %v267, %v323
      %v364 = vmul.f32 %v268, %v324
      %v365 = vmul.f32 %v269, %v324
      %v366 = vmul.f32 %v270, %v324
      %v367 = vmul.f32 %v271, %v325
      %v368 = vmul.f32 %v272, %v325
      %v369 = vmul.f32 %v273, %v325
      %v370 = vmul.f32 %v274, %v326
      %v371 = vmul.f32 %v275, %v326
      %v372 = vmul.f32 %v276, %v326
      %v373 = vmul.f32 %v277, %v327
      %v374 = vmul.f32 %v278, %v327
      %v375 = vmul.f32 %v279, %v327
      %v376 = vmul.f32 %v280, %v328
      %v377 = vmul.f32 %v281, %v328
      %v378 = vmul.f32 %v282, %v328
      %v379 = vmul.f32 %v283, %v329
      %v380 = vmul.f32 %v284, %v329
      %v381 = vmul.f32 %v285, %v329
      %v382 = vmul.f32 %v286, %v330
      %v383 = vmul.f32 %v287, %v330
      %v384 = vmul.f32 %v288, %v330
      %v385 = vmul.f32 %v289, %v331
      %v386 = vmul.f32 %v290, %v331
      %v387 = vmul.f32 %v291, %v331
      %v388 = vmul.f32 %v292, %v332
      %v389 = vmul.f32 %v293, %v332
      %v390 = vmul.f32 %v294, %v332
      %v391 = vmul.f32 %v295, %v333
      %v392 = vmul.f32 %v296, %v333
      %v393 = vmul.f32 %v297, %v333
      %v394 = vmul.f32 %v298, %v334
      %v395 = vmul.f32 %v299, %v334
      %v396 = vmul.f32 %v300, %v334
      %v397 = vmul.f32 %v301, %v335
      %v398 = vmul.f32 %v302, %v335
      %v399 = vmul.f32 %v303, %v335
      %vm400 = vcmask 261120
      %v401 = vsel %vm400, %v352, 0.0
      %402 = vadd.xlane.f32.xlu0 %v401
      %v403 = vpop.xlane.xlu0 %402
      %v404 = vsel %vm400, %v353, 0.0
      %405 = vadd.xlane.f32.xlu0 %v404
      %v406 = vpop.xlane.xlu0 %405
      %v407 = vsel %vm400, %v354, 0.0
      %408 = vadd.xlane.f32.xlu0 %v407
      %v409 = vpop.xlane.xlu0 %408
      %v410 = vsel %vm400, %v355, 0.0
      %411 = vadd.xlane.f32.xlu0 %v410
      %v412 = vpop.xlane.xlu0 %411
      %v413 = vsel %vm400, %v356, 0.0
      %414 = vadd.xlane.f32.xlu0 %v413
      %v415 = vpop.xlane.xlu0 %414
      %v416 = vsel %vm400, %v357, 0.0
      %417 = vadd.xlane.f32.xlu0 %v416
      %v418 = vpop.xlane.xlu0 %417
      %v419 = vsel %vm400, %v358, 0.0
      %420 = vadd.xlane.f32.xlu0 %v419
      %v421 = vpop.xlane.xlu0 %420
      %v422 = vsel %vm400, %v359, 0.0
      %423 = vadd.xlane.f32.xlu0 %v422
      %v424 = vpop.xlane.xlu0 %423
      %v425 = vsel %vm400, %v360, 0.0
      %426 = vadd.xlane.f32.xlu0 %v425
      %v427 = vpop.xlane.xlu0 %426
      %v428 = vsel %vm400, %v361, 0.0
      %429 = vadd.xlane.f32.xlu0 %v428
      %v430 = vpop.xlane.xlu0 %429
      %v431 = vsel %vm400, %v362, 0.0
      %432 = vadd.xlane.f32.xlu0 %v431
      %v433 = vpop.xlane.xlu0 %432
      %v434 = vsel %vm400, %v363, 0.0
      %435 = vadd.xlane.f32.xlu0 %v434
      %v436 = vpop.xlane.xlu0 %435
      %v437 = vsel %vm400, %v364, 0.0
      %438 = vadd.xlane.f32.xlu0 %v437
      %v439 = vpop.xlane.xlu0 %438
      %v440 = vsel %vm400, %v365, 0.0
      %441 = vadd.xlane.f32.xlu0 %v440
      %v442 = vpop.xlane.xlu0 %441
      %v443 = vsel %vm400, %v366, 0.0
      %444 = vadd.xlane.f32.xlu0 %v443
      %v445 = vpop.xlane.xlu0 %444
      %v446 = vsel %vm400, %v367, 0.0
      %447 = vadd.xlane.f32.xlu0 %v446
      %v448 = vpop.xlane.xlu0 %447
      %v449 = vsel %vm400, %v368, 0.0
      %450 = vadd.xlane.f32.xlu0 %v449
      %v451 = vpop.xlane.xlu0 %450
      %v452 = vsel %vm400, %v369, 0.0
      %453 = vadd.xlane.f32.xlu0 %v452
      %v454 = vpop.xlane.xlu0 %453
      %v455 = vsel %vm400, %v370, 0.0
      %456 = vadd.xlane.f32.xlu0 %v455
      %v457 = vpop.xlane.xlu0 %456
      %v458 = vsel %vm400, %v371, 0.0
      %459 = vadd.xlane.f32.xlu0 %v458
      %v460 = vpop.xlane.xlu0 %459
      %v461 = vsel %vm400, %v372, 0.0
      %462 = vadd.xlane.f32.xlu0 %v461
      %v463 = vpop.xlane.xlu0 %462
      %v464 = vsel %vm400, %v373, 0.0
      %465 = vadd.xlane.f32.xlu0 %v464
      %v466 = vpop.xlane.xlu0 %465
      %v467 = vsel %vm400, %v374, 0.0
      %468 = vadd.xlane.f32.xlu0 %v467
      %v469 = vpop.xlane.xlu0 %468
      %v470 = vsel %vm400, %v375, 0.0
      %471 = vadd.xlane.f32.xlu0 %v470
      %v472 = vpop.xlane.xlu0 %471
      %v473 = vsel %vm400, %v376, 0.0
      %474 = vadd.xlane.f32.xlu0 %v473
      %v475 = vpop.xlane.xlu0 %474
      %v476 = vsel %vm400, %v377, 0.0
      %477 = vadd.xlane.f32.xlu0 %v476
      %v478 = vpop.xlane.xlu0 %477
      %v479 = vsel %vm400, %v378, 0.0
      %480 = vadd.xlane.f32.xlu0 %v479
      %v481 = vpop.xlane.xlu0 %480
      %v482 = vsel %vm400, %v379, 0.0
      %483 = vadd.xlane.f32.xlu0 %v482
      %v484 = vpop.xlane.xlu0 %483
      %v485 = vsel %vm400, %v380, 0.0
      %486 = vadd.xlane.f32.xlu0 %v485
      %v487 = vpop.xlane.xlu0 %486
      %v488 = vsel %vm400, %v381, 0.0
      %489 = vadd.xlane.f32.xlu0 %v488
      %v490 = vpop.xlane.xlu0 %489
      %v491 = vsel %vm400, %v382, 0.0
      %492 = vadd.xlane.f32.xlu0 %v491
      %v493 = vpop.xlane.xlu0 %492
      %v494 = vsel %vm400, %v383, 0.0
      %495 = vadd.xlane.f32.xlu0 %v494
      %v496 = vpop.xlane.xlu0 %495
      %v497 = vsel %vm400, %v384, 0.0
      %498 = vadd.xlane.f32.xlu0 %v497
      %v499 = vpop.xlane.xlu0 %498
      %v500 = vsel %vm400, %v385, 0.0
      %501 = vadd.xlane.f32.xlu0 %v500
      %v502 = vpop.xlane.xlu0 %501
      %v503 = vsel %vm400, %v386, 0.0
      %504 = vadd.xlane.f32.xlu0 %v503
      %v505 = vpop.xlane.xlu0 %504
      %v506 = vsel %vm400, %v387, 0.0
      %507 = vadd.xlane.f32.xlu0 %v506
      %v508 = vpop.xlane.xlu0 %507
      %v509 = vsel %vm400, %v388, 0.0
      %510 = vadd.xlane.f32.xlu0 %v509
      %v511 = vpop.xlane.xlu0 %510
      %v512 = vsel %vm400, %v389, 0.0
      %513 = vadd.xlane.f32.xlu0 %v512
      %v514 = vpop.xlane.xlu0 %513
      %v515 = vsel %vm400, %v390, 0.0
      %516 = vadd.xlane.f32.xlu0 %v515
      %v517 = vpop.xlane.xlu0 %516
      %v518 = vsel %vm400, %v391, 0.0
      %519 = vadd.xlane.f32.xlu0 %v518
      %v520 = vpop.xlane.xlu0 %519
      %v521 = vsel %vm400, %v392, 0.0
      %522 = vadd.xlane.f32.xlu0 %v521
      %v523 = vpop.xlane.xlu0 %522
      %v524 = vsel %vm400, %v393, 0.0
      %525 = vadd.xlane.f32.xlu0 %v524
      %v526 = vpop.xlane.xlu0 %525
      %v527 = vsel %vm400, %v394, 0.0
      %528 = vadd.xlane.f32.xlu0 %v527
      %v529 = vpop.xlane.xlu0 %528
      %v530 = vsel %vm400, %v395, 0.0
      %531 = vadd.xlane.f32.xlu0 %v530
      %v532 = vpop.xlane.xlu0 %531
      %v533 = vsel %vm400, %v396, 0.0
      %534 = vadd.xlane.f32.xlu0 %v533
      %v535 = vpop.xlane.xlu0 %534
      %v536 = vsel %vm400, %v397, 0.0
      %537 = vadd.xlane.f32.xlu0 %v536
      %v538 = vpop.xlane.xlu0 %537
      %v539 = vsel %vm400, %v398, 0.0
      %540 = vadd.xlane.f32.xlu0 %v539
      %v541 = vpop.xlane.xlu0 %540
      %v542 = vsel %vm400, %v399, 0.0
      %543 = vadd.xlane.f32.xlu0 %v542
      %v544 = vpop.xlane.xlu0 %543
      %v545 = vlaneseq
      %v546 = vand.u32 %v545, 127
      %vm547 = vcmp.lt.s32.totalorder %v546, 4
      %vm548 = vcmp.lt.s32.totalorder %v546, 24
      %v549 = vsel %vm548, -1.0, 0.0
      %v550 = vsel %vm547, 1.0, %v549
      %s551 = sadd.s32 %s17, %s18
      %v552 = vlaneseq
      %v553 = vshrl.u32 %v552, 7
      %v554 = vadd.s32 %v553, 8
      %s555 = smul.u32 %s551, 16
      %v556 = vstv %s555
      %v557 = vadd.s32 %v553, %v556
      %v558 = vadd.s32 %v554, %v556
      %vm559 = vcmp.lt.s32.totalorder %v557, 2
      %vm560 = vcmp.lt.s32.totalorder %v558, 2
      %v561 = vsel %vm559, 1, 0
      %v562 = vsel %vm560, 1, 0
      %vm563 = vcmp.eq.s32.totalorder %v561, 1
      %vm564 = vcmp.eq.s32.totalorder %v562, 1
      %v565 = vsel %vm548, 1, 0
      %vm566 = vcmp.eq.s32.totalorder %v565, 1
      %vm567 = vmand %vm563, %vm566
      %vm568 = vmand %vm564, %vm566
      %v617 = vperm.slane %v403, %v546
      %v618 = vadd.s32 %v546, 4294967288
      %v619 = vperm.slane %v406, %v618
      %vm620 = vcmask 130112
      %v621 = vsel %vm620, %v619, %v617
      %v622 = vadd.s32 %v546, 4294967280
      %v623 = vperm.slane %v409, %v622
      %vm624 = vcmask 195712
      %v625 = vsel %vm624, %v623, %v621
      %v626 = vperm.slane %v412, %v546
      %v627 = vperm.slane %v415, %v618
      %v628 = vsel %vm620, %v627, %v626
      %v629 = vperm.slane %v418, %v622
      %v630 = vsel %vm624, %v629, %v628
      %v631 = vperm.slane %v421, %v546
      %v632 = vperm.slane %v424, %v618
      %v633 = vsel %vm620, %v632, %v631
      %v634 = vperm.slane %v427, %v622
      %v635 = vsel %vm624, %v634, %v633
      %v636 = vperm.slane %v430, %v546
      %v637 = vperm.slane %v433, %v618
      %v638 = vsel %vm620, %v637, %v636
      %v639 = vperm.slane %v436, %v622
      %v640 = vsel %vm624, %v639, %v638
      %v641 = vperm.slane %v439, %v546
      %v642 = vperm.slane %v442, %v618
      %v643 = vsel %vm620, %v642, %v641
      %v644 = vperm.slane %v445, %v622
      %v645 = vsel %vm624, %v644, %v643
      %v646 = vperm.slane %v448, %v546
      %v647 = vperm.slane %v451, %v618
      %v648 = vsel %vm620, %v647, %v646
      %v649 = vperm.slane %v454, %v622
      %v650 = vsel %vm624, %v649, %v648
      %v651 = vperm.slane %v457, %v546
      %v652 = vperm.slane %v460, %v618
      %v653 = vsel %vm620, %v652, %v651
      %v654 = vperm.slane %v463, %v622
      %v655 = vsel %vm624, %v654, %v653
      %v656 = vperm.slane %v466, %v546
      %v657 = vperm.slane %v469, %v618
      %v658 = vsel %vm620, %v657, %v656
      %v659 = vperm.slane %v472, %v622
      %v660 = vsel %vm624, %v659, %v658
      %v661 = vperm.slane %v475, %v546
      %v662 = vperm.slane %v478, %v618
      %v663 = vsel %vm620, %v662, %v661
      %v664 = vperm.slane %v481, %v622
      %v665 = vsel %vm624, %v664, %v663
      %v666 = vperm.slane %v484, %v546
      %v667 = vperm.slane %v487, %v618
      %v668 = vsel %vm620, %v667, %v666
      %v669 = vperm.slane %v490, %v622
      %v670 = vsel %vm624, %v669, %v668
      %v671 = vperm.slane %v493, %v546
      %v672 = vperm.slane %v496, %v618
      %v673 = vsel %vm620, %v672, %v671
      %v674 = vperm.slane %v499, %v622
      %v675 = vsel %vm624, %v674, %v673
      %v676 = vperm.slane %v502, %v546
      %v677 = vperm.slane %v505, %v618
      %v678 = vsel %vm620, %v677, %v676
      %v679 = vperm.slane %v508, %v622
      %v680 = vsel %vm624, %v679, %v678
      %v681 = vperm.slane %v511, %v546
      %v682 = vperm.slane %v514, %v618
      %v683 = vsel %vm620, %v682, %v681
      %v684 = vperm.slane %v517, %v622
      %v685 = vsel %vm624, %v684, %v683
      %v686 = vperm.slane %v520, %v546
      %v687 = vperm.slane %v523, %v618
      %v688 = vsel %vm620, %v687, %v686
      %v689 = vperm.slane %v526, %v622
      %v690 = vsel %vm624, %v689, %v688
      %v691 = vperm.slane %v529, %v546
      %v692 = vperm.slane %v532, %v618
      %v693 = vsel %vm620, %v692, %v691
      %v694 = vperm.slane %v535, %v622
      %v695 = vsel %vm624, %v694, %v693
      %v696 = vperm.slane %v538, %v546
      %v697 = vperm.slane %v541, %v618
      %v698 = vsel %vm620, %v697, %v696
      %v699 = vperm.slane %v544, %v622
      %v700 = vsel %vm624, %v699, %v698
      %vm701 = vcmask 1041409
      %v702 = vsel %vm701, %v630, %v625
      %vm703 = vcmask 1042434
      %v704 = vsel %vm703, %v635, %v702
      %vm705 = vcmask 1043459
      %v706 = vsel %vm705, %v640, %v704
      %vm707 = vcmask 1044484
      %v708 = vsel %vm707, %v645, %v706
      %vm709 = vcmask 1045509
      %v710 = vsel %vm709, %v650, %v708
      %vm711 = vcmask 1046534
      %v712 = vsel %vm711, %v655, %v710
      %vm713 = vcmask 1047559
      %v714 = vsel %vm713, %v660, %v712
      %v715 = vsel %vm701, %v670, %v665
      %v716 = vsel %vm703, %v675, %v715
      %v717 = vsel %vm705, %v680, %v716
      %v718 = vsel %vm707, %v685, %v717
      %v719 = vsel %vm709, %v690, %v718
      %v720 = vsel %vm711, %v695, %v719
      %v721 = vsel %vm713, %v700, %v720
      %v724 = vmul.f32 %v550, %v714
      %v725 = vmul.f32 %v550, %v721
      %v726 = vmin.f32 %v724, 0.0
      %v727 = vmin.f32 %v725, 0.0
      %v728 = vand.u32 2147483647, %v724
      %v729 = vand.u32 2147483647, %v725
      %v730 = vsub.f32 0.0, %v728
      %v731 = vsub.f32 0.0, %v729
      %v732 = vmul.f32 %v730, 1.442695
      %v733 = vpow.pop %v732
      %v734 = vmul.f32 %v731, 1.442695
      %v735 = vpow.pop %v734
      %v736 = vadd.f32 %v733, 1.0
      %v737 = vlog2.pop %v736
      %v738 = vmul.f32 %v737, 0.6931472
      %v739 = vmul.f32 -0.5, %v733
      %v740 = vadd.f32 %v739, 1.0
      %v741 = vmul.f32 %v740, %v733
      %v742 = vand.u32 2147483647, %v733
      %vm743 = vcmp.lt.f32.partialorder %v742, 0.0004427343
      %v744 = vsel %vm743, %v741, %v738
      %v745 = vadd.f32 %v735, 1.0
      %v746 = vlog2.pop %v745
      %v747 = vmul.f32 %v746, 0.6931472
      %v748 = vmul.f32 -0.5, %v735
      %v749 = vadd.f32 %v748, 1.0
      %v750 = vmul.f32 %v749, %v735
      %v751 = vand.u32 2147483647, %v735
      %vm752 = vcmp.lt.f32.partialorder %v751, 0.0004427343
      %v753 = vsel %vm752, %v750, %v747
      %v754 = vsub.f32 %v726, %v744
      %v755 = vsub.f32 %v727, %v753
      %v756 = vsel %vm567, %v754, 0.0
      %v757 = vsel %vm568, %v755, 0.0
      %v758 = vld [vmem:[%s196] sm:$0xff]
      %v759 = vld [vmem:[%s196 + $0x8] sm:$0xff]
      %v760 = vadd.f32 %v758, %v756
      %v761 = vadd.f32 %v759, %v757
      %vm762 = vcmask 195584
      %763 = vst.msk [vmem:[%s196] sm:$0xff] %vm762, %v760
      %764 = vst.msk [vmem:[%s196 + $0x8] sm:$0xff] %vm762, %v761
      %p765 = scmp.lt.s32.totalorder %s17, 1
      %s766 = scalar_select %p765, %s17, 1
      %s767 = smul.addr %s766, 2
      %s768 = smul.addr %s767, 8
      %s769 = scalar_lea.vmem %s2, %s768
      // Predicated region
      $region33: #{skipgram_forward.1} parent=27 // pred_check
        %p770 = pneg %p99
      $region34: #{skipgram_forward.1} parent=27 // pred_check_branch
        %772 = sbr.rel (%p770) target = $region36
      $region35: #{skipgram_forward.1} parent=27 // pred_region
        _
      $region36: #{skipgram_forward.1} parent=27 // pred_fallthru
        _
    $region28: #{skipgram_forward.1} parent=5 // pred_fallthru
      _
    %p773 = scmp.le.s32.totalorder 2, %s8
    // Predicated region
    $region37: #{skipgram_forward.1} parent=5 // pred_check
      %p774 = pneg %p773
    $region38: #{skipgram_forward.1} parent=5 // pred_check_branch
      %776 = sbr.rel (%p774) target = $region40
    $region39: #{skipgram_forward.1} parent=5 // pred_region
      %s777 = ssub.s32 %s8, 2
      // Predicated region
      $region41: #{skipgram_forward.1} parent=39 // pred_check
        %p778 = pneg %p105
      $region42: #{skipgram_forward.1} parent=39 // pred_check_branch
        %780 = sbr.rel (%p778) target = $region44
      $region43: #{skipgram_forward.1} parent=39 // pred_region
        %p781 = scmp.lt.s32.totalorder %s19, 1
        %s782 = scalar_select %p781, %s19, 1
        %s783 = smul.addr %s782, 2
        %s784 = smul.addr %s783, 8
        %s785 = scalar_lea.vmem %s2, %s784
      $region44: #{skipgram_forward.1} parent=39 // pred_fallthru
        _
    $region40: #{skipgram_forward.1} parent=5 // pred_fallthru
      _
  $region6: #{skipgram_forward.1} parent=0 // loop_footer
    %s12 = sadd.s32 1, %s8
  $region7: #{skipgram_forward.1} parent=0 // loop_footer_branch
    %7 = sbr.rel target = $region3
  $region8: #{skipgram_forward.1} parent=0 // loop_exit
    _

</llo_original>
